<compile_context>
chip_gen: v7x
topology: tpu7x:2x2x1
jax: 0.10.0
libtpu: 0.0.40
codegen_flags: <defaults>
</compile_context>

<pallas_src>
from functools import partial

import jax
import jax.numpy as jnp
from jax.experimental import pallas as pl
from jax.experimental.pallas import tpu as pltpu


def _init_embed_kernel(x_ref, w_ref, b_ref, o_ref):
    # x_ref: [TM, 2]   w_ref: [2, E] (= W.T)   b_ref: [1, E]   o_ref: [TM, E]
    x = x_ref[...].astype(jnp.float32)
    w = w_ref[...].astype(jnp.float32)
    b = b_ref[...].astype(jnp.float32)
    # K=2 contraction as two broadcast FMAs on the VPU (exact f32 accumulate).
    out = x[:, 0:1] * w[0:1, :] + x[:, 1:2] * w[1:2, :] + b
    o_ref[...] = out.astype(o_ref.dtype)


def _round_up(x, m):
    return ((x + m - 1) // m) * m


def _pick_tile_m(M, E, target_out_tile_bytes=4 << 20):
    """Pick the M-tile: ~4 MiB output tile, >=2 grid steps when M allows (v7x)."""
    tm = (target_out_tile_bytes // (E * 4)) // 128 * 128
    tm = max(256, min(8192, tm))
    if M > 256:
        # Keep at least two grid steps so "parallel" can use both v7x TensorCores.
        tm = min(tm, _round_up(pl.cdiv(M, 2), 128))
    if tm >= M:
        return M  # single block; any M is legal when the block equals the full dim
    return tm


@partial(jax.jit, static_argnames=("tile_m", "out_dtype"))
def tsp_init_embedding(locs, weight, bias, *, tile_m=None, out_dtype=None):
    """locs: [B, N, 2]; weight: [E, 2] (PyTorch nn.Linear layout); bias: [E].

    Returns locs @ weight.T + bias with shape [B, N, E].
    """
    assert locs.ndim == 3 and locs.shape[-1] == 2, "locs must be [B, N, 2]"
    assert weight.ndim == 2 and weight.shape[1] == 2, "weight must be [embed_dim, 2]"
    B, N, node_dim = locs.shape
    E = weight.shape[0]
    if bias is None:
        bias = jnp.zeros((E,), dtype=weight.dtype)
    assert bias.shape == (E,)
    out_dtype = locs.dtype if out_dtype is None else out_dtype

    M = B * N
    x2d = locs.reshape(M, node_dim)          # free reshape, no copy
    w_t = weight.T                           # [2, E], tiny
    b2d = bias.reshape(1, E)

    if tile_m is None:
        tm = _pick_tile_m(M, E)
    else:
        tm = M if tile_m >= M else _round_up(int(tile_m), 8)
    grid_m = pl.cdiv(M, tm)

    # VMEM accounting: x block is lane-padded to 128 lanes; both in/out double-buffered.
    vmem_needed = 2 * (tm * E * 4) + 2 * (tm * 128 * 4)
    vmem_limit = int(min(48 << 20, max(16 << 20, vmem_needed * 3 // 2 + (1 << 20))))

    out2d = pl.pallas_call(
        _init_embed_kernel,
        out_shape=jax.ShapeDtypeStruct((M, E), out_dtype),
        grid=(grid_m,),
        in_specs=[
            pl.BlockSpec((tm, node_dim), lambda i: (i, 0)),  # x tile (pipelined)
            pl.BlockSpec((node_dim, E), lambda i: (0, 0)),   # weight (resident)
            pl.BlockSpec((1, E), lambda i: (0, 0)),          # bias (resident)
        ],
        out_specs=pl.BlockSpec((tm, E), lambda i: (i, 0)),
        compiler_params=pltpu.CompilerParams(
            dimension_semantics=("parallel",),  # disjoint output tiles -> megacore on v7x
            vmem_limit_bytes=vmem_limit,
        ),
    )(x2d, w_t, b2d)

    return out2d.reshape(B, N, E)


if __name__ == "__main__":
    key = jax.random.PRNGKey(0)
    k_locs, k_w, k_b = jax.random.split(key, 3)

    batch, num_nodes, node_dim, embed_dim = 2, 64, 2, 128

    # PyTorch nn.Linear(2, embed_dim): weight [embed_dim, 2], bias [embed_dim].
    weight = jax.random.uniform(k_w, (embed_dim, node_dim), jnp.float32, -0.5, 0.5)
    bias = jax.random.uniform(k_b, (embed_dim,), jnp.float32, -0.5, 0.5)
    locs = jax.random.uniform(k_locs, (batch, num_nodes, node_dim), jnp.float32)

    wt = weight.T  # [2, E]
    # Exact-f32 elementwise reference (mirrors the kernel's arithmetic).
    ref = locs[..., 0:1] * wt[0] + locs[..., 1:2] * wt[1] + bias

    # 1) Single-block path (M = 128).
    out = jax.block_until_ready(tsp_init_embedding(locs, weight, bias))
    assert out.shape == (batch, num_nodes, embed_dim)
    assert jnp.allclose(out, ref, atol=1e-5, rtol=1e-5)

    # 2) Auto-tiled multi-block path with a partial last block (M = 300, no padding/slice).
    locs2 = jax.random.uniform(k_locs, (3, 100, node_dim), jnp.float32)
    ref2 = locs2[..., 0:1] * wt[0] + locs2[..., 1:2] * wt[1] + bias
    out2 = jax.block_until_ready(tsp_init_embedding(locs2, weight, bias))
    assert out2.shape == (3, 100, embed_dim)
    assert jnp.allclose(out2, ref2, atol=1e-5, rtol=1e-5)

    # 3) Explicit tile + bf16 output path (halved HBM write traffic).
    out3 = jax.block_until_ready(
        tsp_init_embedding(locs2, weight, bias, tile_m=128, out_dtype=jnp.bfloat16)
    )
    assert out3.dtype == jnp.bfloat16
    assert jnp.allclose(out3.astype(jnp.float32), ref2, atol=1e-2, rtol=0)

    print("KERNEL_OK")
</pallas_src>

<mosaic_0001>
module attributes {stable_mosaic.version = 11 : i64} {
  func.func @_init_embed_kernel(%arg0: i32, %arg1: memref<128x2xf32, #tpu.memory_space<vmem>>, %arg2: memref<2x128xf32, #tpu.memory_space<vmem>>, %arg3: memref<1x128xf32, #tpu.memory_space<vmem>>, %arg4: memref<128x128xf32, #tpu.memory_space<vmem>>) attributes {dimension_semantics = [#tpu.dimension_semantics<parallel>], iteration_bounds = array<i64: 1>, scalar_prefetch = 0 : i64, scratch_operands = 0 : i64, tpu.core_type = #tpu.core_type<tc>, window_params = [{transform_indices = @transform_0, window_bounds = array<i64: 128, 2>}, {pipeline_mode = #tpu.pipeline_mode<synchronous>, transform_indices = @transform_1, window_bounds = array<i64: 2, 128>}, {pipeline_mode = #tpu.pipeline_mode<synchronous>, transform_indices = @transform_2, window_bounds = array<i64: 1, 128>}, {transform_indices = @transform_3, window_bounds = array<i64: 128, 128>}]} {
    %c0 = arith.constant 0 : index
    %c0_0 = arith.constant 0 : index
    %0 = vector.load %arg1[%c0, %c0_0] : memref<128x2xf32, #tpu.memory_space<vmem>>, vector<128x2xf32>
    %c0_1 = arith.constant 0 : index
    %c0_2 = arith.constant 0 : index
    %1 = vector.load %arg2[%c0_1, %c0_2] : memref<2x128xf32, #tpu.memory_space<vmem>>, vector<2x128xf32>
    %c0_3 = arith.constant 0 : index
    %c0_4 = arith.constant 0 : index
    %2 = vector.load %arg3[%c0_3, %c0_4] : memref<1x128xf32, #tpu.memory_space<vmem>>, vector<1x128xf32>
    %3 = vector.extract_strided_slice %0 {offsets = [0, 0], sizes = [128, 1], strides = [1, 1]} : vector<128x2xf32> to vector<128x1xf32>
    %4 = vector.extract_strided_slice %1 {offsets = [0, 0], sizes = [1, 128], strides = [1, 1]} : vector<2x128xf32> to vector<1x128xf32>
    %5 = vector.broadcast %3 : vector<128x1xf32> to vector<128x128xf32>
    %6 = vector.broadcast %4 : vector<1x128xf32> to vector<128x128xf32>
    %7 = arith.mulf %5, %6 : vector<128x128xf32>
    %8 = vector.extract_strided_slice %0 {offsets = [0, 1], sizes = [128, 1], strides = [1, 1]} : vector<128x2xf32> to vector<128x1xf32>
    %9 = vector.extract_strided_slice %1 {offsets = [1, 0], sizes = [1, 128], strides = [1, 1]} : vector<2x128xf32> to vector<1x128xf32>
    %10 = vector.broadcast %8 : vector<128x1xf32> to vector<128x128xf32>
    %11 = vector.broadcast %9 : vector<1x128xf32> to vector<128x128xf32>
    %12 = arith.mulf %10, %11 : vector<128x128xf32>
    %13 = arith.addf %7, %12 : vector<128x128xf32>
    %14 = vector.broadcast %2 : vector<1x128xf32> to vector<128x128xf32>
    %15 = arith.addf %13, %14 : vector<128x128xf32>
    %c0_5 = arith.constant 0 : index
    %c0_6 = arith.constant 0 : index
    %16 = vector.load %arg4[%c0_5, %c0_6] : memref<128x128xf32, #tpu.memory_space<vmem>>, vector<128x128xf32>
    tpu.vector_store %arg4[%c0_5, %c0_6], %15 {strides = array<i32>} : memref<128x128xf32, #tpu.memory_space<vmem>>, vector<128x128xf32>,
    return
  }
  func.func @transform_0(%arg0: i32) -> (i32, i32) {
    %c0_i32 = arith.constant 0 : i32
    %c0_i32_0 = arith.constant 0 : i32
    return %arg0, %c0_i32 : i32, i32
  }
  func.func @transform_1(%arg0: i32) -> (i32, i32) {
    %c0_i32 = arith.constant 0 : i32
    %c0_i32_0 = arith.constant 0 : i32
    %c0_i32_1 = arith.constant 0 : i32
    return %c0_i32, %c0_i32_0 : i32, i32
  }
  func.func @transform_2(%arg0: i32) -> (i32, i32) {
    %c0_i32 = arith.constant 0 : i32
    %c0_i32_0 = arith.constant 0 : i32
    %c0_i32_1 = arith.constant 0 : i32
    return %c0_i32, %c0_i32_0 : i32, i32
  }
  func.func @transform_3(%arg0: i32) -> (i32, i32) {
    %c0_i32 = arith.constant 0 : i32
    %c0_i32_0 = arith.constant 0 : i32
    return %arg0, %c0_i32 : i32, i32
  }
}

</mosaic_0001>

<llo_original>
// kernel: tsp_init_embedding.1
$region0: #{tsp_init_embedding.1}
  #allocation0 [shape = 'u32[]', space=smem, size = 0x4, offset = 0x4, fixed_abs, tag = 'smem constant byte address 0x4 - core index']
  #allocation1 [shape = 'u32[144,128]{1,0:T(1,128)}', space=vmem, size = 0x12000, scoped, tag = 'internal scratch']
  %s0 = inlined_call_operand.vmem [shape: f32[128,2], index: 0, kind: input, shape index: {}]
  %s1 = inlined_call_operand.vmem [shape: f32[2,128], index: 1, kind: input, shape index: {}]
  %s2 = inlined_call_operand.vmem [shape: f32[1,128], index: 2, kind: input, shape index: {}]
  %s3 = inlined_call_operand.hbm [shape: f32[128,128], index: 3, kind: output, shape index: {}]
  %s4 = sld [smem:[#allocation0]]
  $region22: #{tsp_init_embedding.1} parent=0
    _
  %s6 = ssub.s32 1, %s4
  %s7 = scalar_select 0, %s6, %s4
  $region1: #{tsp_init_embedding.1} parent=0
    #allocation2 [shape = 'u8[65536]{0}', space=vmem, size = 0x10000, scoped, tag = 'output window, operand 0, single buffered']
    #allocation3 [shape = 's32[1]{0}', space=sflag, size = 0x4, scoped, tag = 'scoped memory for tsp_init_embedding.1']
    %8 = vsyncpa [#allocation3], 0
    // Predicated region
    $region2: #{tsp_init_embedding.1} parent=1 // pred_check
      _
    $region3: #{tsp_init_embedding.1} parent=1 // pred_check_branch
      %10 = sbr.rel (0) target = $region5
    $region4: #{tsp_init_embedding.1} parent=1 // pred_region
      _
    $region5: #{tsp_init_embedding.1} parent=1 // pred_fallthru
      _
    // Predicated region
    $region6: #{tsp_init_embedding.1} parent=1 // pred_check
      _
    $region7: #{tsp_init_embedding.1} parent=1 // pred_check_branch
      %12 = sbr.rel (0) target = $region9
    $region8: #{tsp_init_embedding.1} parent=1 // pred_region
      _
    $region9: #{tsp_init_embedding.1} parent=1 // pred_fallthru
      _
    // Predicated region
    $region10: #{tsp_init_embedding.1} parent=1 // pred_check
      _
    $region11: #{tsp_init_embedding.1} parent=1 // pred_check_branch
      %14 = sbr.rel (0) target = $region13
    $region12: #{tsp_init_embedding.1} parent=1 // pred_region
      _
    $region13: #{tsp_init_embedding.1} parent=1 // pred_fallthru
      _
    %v15 = vld [vmem:[%s0] sm:$0xff]
    %v16 = vld [vmem:[%s0 + $0x8] sm:$0xff]
    %v17 = vld [vmem:[%s0 + $0x10] sm:$0xff]
    %v18 = vld [vmem:[%s0 + $0x18] sm:$0xff]
    %v19 = vld [vmem:[%s0 + $0x20] sm:$0xff]
    %v20 = vld [vmem:[%s0 + $0x28] sm:$0xff]
    %v21 = vld [vmem:[%s0 + $0x30] sm:$0xff]
    %v22 = vld [vmem:[%s0 + $0x38] sm:$0xff]
    %v23 = vld [vmem:[%s0 + $0x40] sm:$0xff]
    %v24 = vld [vmem:[%s0 + $0x48] sm:$0xff]
    %v25 = vld [vmem:[%s0 + $0x50] sm:$0xff]
    %v26 = vld [vmem:[%s0 + $0x58] sm:$0xff]
    %v27 = vld [vmem:[%s0 + $0x60] sm:$0xff]
    %v28 = vld [vmem:[%s0 + $0x68] sm:$0xff]
    %v29 = vld [vmem:[%s0 + $0x70] sm:$0xff]
    %v30 = vld [vmem:[%s0 + $0x78] sm:$0xff]
    %v31 = vld [vmem:[%s1] sm:$0x3]
    %v32 = vld [vmem:[%s2] sm:$0x1]
    %34 = vset.pattern.permute.xlu0 0
    %35 = vperm.xlu0 %34, %v15
    %v36 = vpop.permute.xlu0 %35
    %39 = vset.pattern.permute.xlu0 0
    %40 = vperm.xlu0 %39, %v16
    %v41 = vpop.permute.xlu0 %40
    %44 = vset.pattern.permute.xlu0 0
    %45 = vperm.xlu0 %44, %v17
    %v46 = vpop.permute.xlu0 %45
    %49 = vset.pattern.permute.xlu0 0
    %50 = vperm.xlu0 %49, %v18
    %v51 = vpop.permute.xlu0 %50
    %54 = vset.pattern.permute.xlu0 0
    %55 = vperm.xlu0 %54, %v19
    %v56 = vpop.permute.xlu0 %55
    %59 = vset.pattern.permute.xlu0 0
    %60 = vperm.xlu0 %59, %v20
    %v61 = vpop.permute.xlu0 %60
    %64 = vset.pattern.permute.xlu0 0
    %65 = vperm.xlu0 %64, %v21
    %v66 = vpop.permute.xlu0 %65
    %69 = vset.pattern.permute.xlu0 0
    %70 = vperm.xlu0 %69, %v22
    %v71 = vpop.permute.xlu0 %70
    %74 = vset.pattern.permute.xlu0 0
    %75 = vperm.xlu0 %74, %v23
    %v76 = vpop.permute.xlu0 %75
    %79 = vset.pattern.permute.xlu0 0
    %80 = vperm.xlu0 %79, %v24
    %v81 = vpop.permute.xlu0 %80
    %84 = vset.pattern.permute.xlu0 0
    %85 = vperm.xlu0 %84, %v25
    %v86 = vpop.permute.xlu0 %85
    %89 = vset.pattern.permute.xlu0 0
    %90 = vperm.xlu0 %89, %v26
    %v91 = vpop.permute.xlu0 %90
    %94 = vset.pattern.permute.xlu0 0
    %95 = vperm.xlu0 %94, %v27
    %v96 = vpop.permute.xlu0 %95
    %99 = vset.pattern.permute.xlu0 0
    %100 = vperm.xlu0 %99, %v28
    %v101 = vpop.permute.xlu0 %100
    %104 = vset.pattern.permute.xlu0 0
    %105 = vperm.xlu0 %104, %v29
    %v106 = vpop.permute.xlu0 %105
    %109 = vset.pattern.permute.xlu0 0
    %110 = vperm.xlu0 %109, %v30
    %v111 = vpop.permute.xlu0 %110
    %v113 = vlaneseq
    %v114 = vshrl.u32 %v113, 7
    %v115 = vsub.s32 0, %v114
    %v116 = vrot.slane %v31, %v115
    %v117 = vmul.f32 %v36, %v116
    %v118 = vmul.f32 %v41, %v116
    %v119 = vmul.f32 %v46, %v116
    %v120 = vmul.f32 %v51, %v116
    %v121 = vmul.f32 %v56, %v116
    %v122 = vmul.f32 %v61, %v116
    %v123 = vmul.f32 %v66, %v116
    %v124 = vmul.f32 %v71, %v116
    %v125 = vmul.f32 %v76, %v116
    %v126 = vmul.f32 %v81, %v116
    %v127 = vmul.f32 %v86, %v116
    %v128 = vmul.f32 %v91, %v116
    %v129 = vmul.f32 %v96, %v116
    %v130 = vmul.f32 %v101, %v116
    %v131 = vmul.f32 %v106, %v116
    %v132 = vmul.f32 %v111, %v116
    %133 = vset.pattern.permute.xlu0 1
    %134 = vperm.xlu0 %133, %v15
    %v135 = vpop.permute.xlu0 %134
    %137 = vset.pattern.permute.xlu0 1
    %138 = vperm.xlu0 %137, %v16
    %v139 = vpop.permute.xlu0 %138
    %141 = vset.pattern.permute.xlu0 1
    %142 = vperm.xlu0 %141, %v17
    %v143 = vpop.permute.xlu0 %142
    %145 = vset.pattern.permute.xlu0 1
    %146 = vperm.xlu0 %145, %v18
    %v147 = vpop.permute.xlu0 %146
    %149 = vset.pattern.permute.xlu0 1
    %150 = vperm.xlu0 %149, %v19
    %v151 = vpop.permute.xlu0 %150
    %153 = vset.pattern.permute.xlu0 1
    %154 = vperm.xlu0 %153, %v20
    %v155 = vpop.permute.xlu0 %154
    %157 = vset.pattern.permute.xlu0 1
    %158 = vperm.xlu0 %157, %v21
    %v159 = vpop.permute.xlu0 %158
    %161 = vset.pattern.permute.xlu0 1
    %162 = vperm.xlu0 %161, %v22
    %v163 = vpop.permute.xlu0 %162
    %165 = vset.pattern.permute.xlu0 1
    %166 = vperm.xlu0 %165, %v23
    %v167 = vpop.permute.xlu0 %166
    %169 = vset.pattern.permute.xlu0 1
    %170 = vperm.xlu0 %169, %v24
    %v171 = vpop.permute.xlu0 %170
    %173 = vset.pattern.permute.xlu0 1
    %174 = vperm.xlu0 %173, %v25
    %v175 = vpop.permute.xlu0 %174
    %177 = vset.pattern.permute.xlu0 1
    %178 = vperm.xlu0 %177, %v26
    %v179 = vpop.permute.xlu0 %178
    %181 = vset.pattern.permute.xlu0 1
    %182 = vperm.xlu0 %181, %v27
    %v183 = vpop.permute.xlu0 %182
    %185 = vset.pattern.permute.xlu0 1
    %186 = vperm.xlu0 %185, %v28
    %v187 = vpop.permute.xlu0 %186
    %189 = vset.pattern.permute.xlu0 1
    %190 = vperm.xlu0 %189, %v29
    %v191 = vpop.permute.xlu0 %190
    %193 = vset.pattern.permute.xlu0 1
    %194 = vperm.xlu0 %193, %v30
    %v195 = vpop.permute.xlu0 %194
    %v197 = vlaneseq
    %v198 = vshrl.u32 %v197, 7
    %v199 = vsub.s32 1, %v198
    %v200 = vrot.slane %v31, %v199
    %v201 = vmul.f32 %v135, %v200
    %v202 = vmul.f32 %v139, %v200
    %v203 = vmul.f32 %v143, %v200
    %v204 = vmul.f32 %v147, %v200
    %v205 = vmul.f32 %v151, %v200
    %v206 = vmul.f32 %v155, %v200
    %v207 = vmul.f32 %v159, %v200
    %v208 = vmul.f32 %v163, %v200
    %v209 = vmul.f32 %v167, %v200
    %v210 = vmul.f32 %v171, %v200
    %v211 = vmul.f32 %v175, %v200
    %v212 = vmul.f32 %v179, %v200
    %v213 = vmul.f32 %v183, %v200
    %v214 = vmul.f32 %v187, %v200
    %v215 = vmul.f32 %v191, %v200
    %v216 = vmul.f32 %v195, %v200
    %v217 = vadd.f32 %v117, %v201
    %v218 = vadd.f32 %v118, %v202
    %v219 = vadd.f32 %v119, %v203
    %v220 = vadd.f32 %v120, %v204
    %v221 = vadd.f32 %v121, %v205
    %v222 = vadd.f32 %v122, %v206
    %v223 = vadd.f32 %v123, %v207
    %v224 = vadd.f32 %v124, %v208
    %v225 = vadd.f32 %v125, %v209
    %v226 = vadd.f32 %v126, %v210
    %v227 = vadd.f32 %v127, %v211
    %v228 = vadd.f32 %v128, %v212
    %v229 = vadd.f32 %v129, %v213
    %v230 = vadd.f32 %v130, %v214
    %v231 = vadd.f32 %v131, %v215
    %v232 = vadd.f32 %v132, %v216
    %v234 = vlaneseq
    %v235 = vshrl.u32 %v234, 7
    %v236 = vsub.s32 0, %v235
    %v237 = vrot.slane %v32, %v236
    %v239 = vadd.f32 %v217, %v237
    %v240 = vadd.f32 %v218, %v237
    %v241 = vadd.f32 %v219, %v237
    %v242 = vadd.f32 %v220, %v237
    %v243 = vadd.f32 %v221, %v237
    %v244 = vadd.f32 %v222, %v237
    %v245 = vadd.f32 %v223, %v237
    %v246 = vadd.f32 %v224, %v237
    %v247 = vadd.f32 %v225, %v237
    %v248 = vadd.f32 %v226, %v237
    %v249 = vadd.f32 %v227, %v237
    %v250 = vadd.f32 %v228, %v237
    %v251 = vadd.f32 %v229, %v237
    %v252 = vadd.f32 %v230, %v237
    %v253 = vadd.f32 %v231, %v237
    %v254 = vadd.f32 %v232, %v237
    %255 = vst [vmem:[#allocation2] sm:$0xff] %v239
    %256 = vst [vmem:[#allocation2 + $0x8] sm:$0xff] %v240
    %257 = vst [vmem:[#allocation2 + $0x10] sm:$0xff] %v241
    %258 = vst [vmem:[#allocation2 + $0x18] sm:$0xff] %v242
    %259 = vst [vmem:[#allocation2 + $0x20] sm:$0xff] %v243
    %260 = vst [vmem:[#allocation2 + $0x28] sm:$0xff] %v244
    %261 = vst [vmem:[#allocation2 + $0x30] sm:$0xff] %v245
    %262 = vst [vmem:[#allocation2 + $0x38] sm:$0xff] %v246
    %263 = vst [vmem:[#allocation2 + $0x40] sm:$0xff] %v247
    %264 = vst [vmem:[#allocation2 + $0x48] sm:$0xff] %v248
    %265 = vst [vmem:[#allocation2 + $0x50] sm:$0xff] %v249
    %266 = vst [vmem:[#allocation2 + $0x58] sm:$0xff] %v250
    %267 = vst [vmem:[#allocation2 + $0x60] sm:$0xff] %v251
    %268 = vst [vmem:[#allocation2 + $0x68] sm:$0xff] %v252
    %269 = vst [vmem:[#allocation2 + $0x70] sm:$0xff] %v253
    %270 = vst [vmem:[#allocation2 + $0x78] sm:$0xff] %v254
    // Predicated region
    $region14: #{tsp_init_embedding.1} parent=1 // pred_check
      _
    $region15: #{tsp_init_embedding.1} parent=1 // pred_check_branch
      %272 = sbr.rel (0) target = $region17
    $region16: #{tsp_init_embedding.1} parent=1 // pred_region
      %s274 = ssub.s32 2048, 2048
      %275 = vsyncadd [#allocation3], %s274
      %s276 = sshll.u32 [#allocation2], 4
      %s277 = int_to_ptr.vmem [resolvable:$true] %s276
      %282 = dma.vmem_to_hbm [thread:$0]  %s277, 2048, %s3, [#allocation3], 128, 128, 8
    $region17: #{tsp_init_embedding.1} parent=1 // pred_fallthru
      _
    // Predicated region
    $region18: #{tsp_init_embedding.1} parent=1 // pred_check
      _
    $region19: #{tsp_init_embedding.1} parent=1 // pred_check_branch
      %284 = sbr.rel (0) target = $region21
    $region20: #{tsp_init_embedding.1} parent=1 // pred_region
      %285 = dma.done [#allocation3], 2048
    $region21: #{tsp_init_embedding.1} parent=1 // pred_fallthru
      _
    %286 = vsyncpa [#allocation3], 1

</llo_original>
